<compile_context>
chip_gen: v7x
topology: tpu7x:2x2x1
jax: 0.10.0
libtpu: 0.0.40
codegen_flags: <defaults>
</compile_context>

<pallas_src>
import functools

import jax
import jax.numpy as jnp
from jax.experimental import pallas as pl
from jax.experimental.pallas import tpu as pltpu


def residual_block2_kernel(x_ref, w1_ref, t1_ref, w2_ref, t2_ref, o_ref, *, seq_len):
    """x_ref: (tile_l + 4, Cp) bf16 haloed window (2 halo rows per side).
       w*_ref: (3*Cp, Cp) bf16 folded conv+BN weights; t*_ref: (1, Cp) f32 shifts.
       o_ref: (tile_l, Cp) f32 output tile."""
    tile_l, c_pad = o_ref.shape
    h_rows = tile_l + 2          # conv1 output rows: 1-row halo per side for conv2

    # ---- conv1 (+ folded BN1) as one wide-K MXU matmul over the haloed window ----
    a1 = jnp.concatenate(
        [x_ref[0:h_rows, :], x_ref[1:h_rows + 1, :], x_ref[2:h_rows + 2, :]],
        axis=-1)                                              # (h_rows, 3*Cp) bf16
    h1 = jnp.dot(a1, w1_ref[...], preferred_element_type=jnp.float32) + t1_ref[...]
    h1 = jnp.maximum(h1, 0.0)     # ReLU (Dropout = identity in eval mode)

    # Zero conv1 outputs at positions outside [0, seq_len) so conv2 sees the
    # same zero padding PyTorch's Conv1d(padding=1) applies at sequence ends.
    base = pl.program_id(1) * tile_l - 1
    pos = base + jax.lax.broadcasted_iota(jnp.int32, (h_rows, 1), 0)
    h1 = jnp.where((pos >= 0) & (pos < seq_len), h1, 0.0)

    # ---- conv2 (+ folded BN2), residual add, ReLU ----
    h1b = h1.astype(x_ref.dtype)                              # bf16 matmul operand
    a2 = jnp.concatenate(
        [h1b[0:tile_l], h1b[1:tile_l + 1], h1b[2:tile_l + 2]], axis=-1)
    out = jnp.dot(a2, w2_ref[...], preferred_element_type=jnp.float32) + t2_ref[...]
    out = out + x_ref[2:tile_l + 2, :].astype(jnp.float32)    # identity (un-haloed rows)
    out = jnp.maximum(out, 0.0)   # ReLU (final Dropout = identity in eval mode)
    o_ref[...] = out.astype(o_ref.dtype)


def fold_params(p, c_pad, eps=1e-5, compute_dtype=jnp.bfloat16):
    """Fold conv bias + BatchNorm into the conv weights, pad channels to c_pad,
       reshape to the fused wide-K layout (3*Cp, Cp), and cast to compute_dtype."""
    def fold(w, b, bn):                       # w: (Cout, Cin, 3) torch layout
        s = bn["gamma"] / jnp.sqrt(bn["var"] + eps)           # (Cout,)
        t = bn["beta"] - bn["mean"] * s
        w_klc = jnp.transpose(w, (2, 1, 0)) * s               # (3, Cin, Cout) * scale
        t_fold = b * s + t                                     # (Cout,)
        cout, cin = w.shape[0], w.shape[1]
        w_pad = jnp.zeros((3, c_pad, c_pad), jnp.float32).at[:, :cin, :cout].set(w_klc)
        t_pad = jnp.zeros((c_pad,), jnp.float32).at[:cout].set(t_fold)
        return (w_pad.reshape(3 * c_pad, c_pad).astype(compute_dtype),
                t_pad.reshape(1, c_pad))
    w1f, t1f = fold(p["w1"], p["b1"], p["bn1"])
    w2f, t2f = fold(p["w2"], p["b2"], p["bn2"])
    return w1f, t1f, w2f, t2f


def residual_block2(x_nlc, params, *, tile_l=256, compute_dtype=jnp.bfloat16, eps=1e-5):
    """x_nlc: (N, L, C) float32.  params: raw (torch-layout) parameter dict."""
    N, L, C = x_nlc.shape
    assert params["w1"].shape[1] == C and params["w1"].shape[0] == params["w2"].shape[0] == C, \
        "residual add requires in_channels == out_channels"

    c_pad = ((C + 127) // 128) * 128          # lane-dense channel dim
    halo = 2                                   # 2 stacked k=3 convs -> 2-row input halo
    tile_l = max(8, min(tile_l, ((L + 7) // 8) * 8))
    tile_l = ((tile_l + 7) // 8) * 8
    num_tiles = pl.cdiv(L, tile_l)
    l_pad = num_tiles * tile_l
    win = tile_l + 2 * halo

    w1f, t1f, w2f, t2f = fold_params(params, c_pad, eps=eps, compute_dtype=compute_dtype)

    # Pad channels + length, add zero halos, cast the matmul operand to bf16,
    # and assemble per-tile haloed windows so the kernel block is a full,
    # (8,128)-friendly Blocked slice (auto double-buffered by Pallas).
    x = jnp.pad(x_nlc, ((0, 0), (halo, l_pad - L + halo), (0, c_pad - C)))
    x = x.astype(compute_dtype)                                # (N, l_pad + 4, Cp)
    x_tiles = jnp.stack(
        [x[:, t * tile_l: t * tile_l + win, :] for t in range(num_tiles)],
        axis=1)                                                # (N, num_tiles, win, Cp)

    kernel = functools.partial(residual_block2_kernel, seq_len=L)

    out = pl.pallas_call(
        kernel,
        out_shape=jax.ShapeDtypeStruct((N, l_pad, c_pad), jnp.float32),
        grid_spec=pltpu.PrefetchScalarGridSpec(
            num_scalar_prefetch=0,
            grid=(N, num_tiles),
            in_specs=[
                pl.BlockSpec((None, None, win, c_pad), lambda n, t: (n, t, 0, 0)),  # x tile
                pl.BlockSpec((3 * c_pad, c_pad), lambda n, t: (0, 0)),              # w1 fused
                pl.BlockSpec((1, c_pad), lambda n, t: (0, 0)),                      # shift1
                pl.BlockSpec((3 * c_pad, c_pad), lambda n, t: (0, 0)),              # w2 fused
                pl.BlockSpec((1, c_pad), lambda n, t: (0, 0)),                      # shift2
            ],
            out_specs=pl.BlockSpec((None, tile_l, c_pad), lambda n, t: (n, t, 0)),
        ),
        compiler_params=pltpu.CompilerParams(
            dimension_semantics=("parallel", "parallel")),
    )(x_tiles, w1f, t1f, w2f, t2f)

    return out[:, :L, :C]


def make_params(key, in_channels, out_channels):
    """Raw parameters in PyTorch layout: conv weights (Cout, Cin, 3), biases,
       and BatchNorm (gamma, beta, running_mean, running_var)."""
    ks = jax.random.split(key, 6)
    w1 = jax.random.normal(ks[0], (out_channels, in_channels, 3), jnp.float32) * 0.3
    b1 = jax.random.normal(ks[1], (out_channels,), jnp.float32) * 0.1
    w2 = jax.random.normal(ks[2], (out_channels, out_channels, 3), jnp.float32) * 0.3
    b2 = jax.random.normal(ks[3], (out_channels,), jnp.float32) * 0.1

    def bn(k):
        kg, kb, km, kv = jax.random.split(k, 4)
        return dict(
            gamma=1.0 + 0.1 * jax.random.normal(kg, (out_channels,), jnp.float32),
            beta=0.1 * jax.random.normal(kb, (out_channels,), jnp.float32),
            mean=0.1 * jax.random.normal(km, (out_channels,), jnp.float32),
            var=jax.random.uniform(kv, (out_channels,), jnp.float32, 0.5, 1.5))

    return dict(w1=w1, b1=b1, bn1=bn(ks[4]), w2=w2, b2=b2, bn2=bn(ks[5]))


def _reference(x_nlc, p, eps=1e-5):
    """Pure-JAX f32 reference of the eval-mode forward (NLC layout, raw params)."""
    def conv(inp, w, b):                       # inp (N,L,C), w (Cout,Cin,3)
        wk = jnp.transpose(w, (2, 1, 0))       # (3, Cin, Cout)
        pad = jnp.pad(inp, ((0, 0), (1, 1), (0, 0)))
        L = inp.shape[1]
        return (jnp.einsum("nlc,cd->nld", pad[:, 0:L], wk[0])
                + jnp.einsum("nlc,cd->nld", pad[:, 1:L + 1], wk[1])
                + jnp.einsum("nlc,cd->nld", pad[:, 2:L + 2], wk[2]) + b)

    def bn(y, s):
        sc = s["gamma"] / jnp.sqrt(s["var"] + eps)
        return (y - s["mean"]) * sc + s["beta"]

    out = jnp.maximum(bn(conv(x_nlc, p["w1"], p["b1"]), p["bn1"]), 0.0)
    out = bn(conv(out, p["w2"], p["b2"]), p["bn2"]) + x_nlc
    return jnp.maximum(out, 0.0)


if __name__ == "__main__":
    N, C, L = 2, 4, 16                        # PyTorch input (N, C, L)
    key = jax.random.PRNGKey(0)
    kx, kp = jax.random.split(key)

    x_ncl = jax.random.normal(kx, (N, C, L), jnp.float32)    # PyTorch Conv1d layout
    x_nlc = jnp.transpose(x_ncl, (0, 2, 1))                  # kernel layout: NLC
    params = make_params(kp, in_channels=C, out_channels=C)

    # tile_l=8 -> two L-tiles, exercising the halo / boundary-masking path.
    out_nlc = residual_block2(x_nlc, params, tile_l=8)
    out_nlc = jax.block_until_ready(out_nlc)
    out_ncl = jnp.transpose(out_nlc, (0, 2, 1))              # back to PyTorch NCL

    ref = _reference(x_nlc, params)
    assert out_ncl.shape == (N, C, L)
    err = float(jnp.max(jnp.abs(out_nlc - ref)))
    assert err < 5e-2, f"mismatch vs reference: max abs err {err}"

    print("KERNEL_OK")
</pallas_src>

<mosaic_0001>
module attributes {stable_mosaic.version = 11 : i64} {
  func.func @residual_block2_kernel(%arg0: i32, %arg1: i32, %arg2: memref<1x1x12x128xbf16, #tpu.memory_space<vmem>>, %arg3: memref<384x128xbf16, #tpu.memory_space<vmem>>, %arg4: memref<1x128xf32, #tpu.memory_space<vmem>>, %arg5: memref<384x128xbf16, #tpu.memory_space<vmem>>, %arg6: memref<1x128xf32, #tpu.memory_space<vmem>>, %arg7: memref<1x8x128xf32, #tpu.memory_space<vmem>>) attributes {dimension_semantics = [#tpu.dimension_semantics<parallel>, #tpu.dimension_semantics<parallel>], iteration_bounds = array<i64: 2, 2>, scalar_prefetch = 0 : i64, scratch_operands = 0 : i64, tpu.core_type = #tpu.core_type<tc>, window_params = [{transform_indices = @transform_0, window_bounds = array<i64: 1, 1, 12, 128>}, {pipeline_mode = #tpu.pipeline_mode<synchronous>, transform_indices = @transform_1, window_bounds = array<i64: 384, 128>}, {pipeline_mode = #tpu.pipeline_mode<synchronous>, transform_indices = @transform_2, window_bounds = array<i64: 1, 128>}, {pipeline_mode = #tpu.pipeline_mode<synchronous>, transform_indices = @transform_3, window_bounds = array<i64: 384, 128>}, {pipeline_mode = #tpu.pipeline_mode<synchronous>, transform_indices = @transform_4, window_bounds = array<i64: 1, 128>}, {transform_indices = @transform_5, window_bounds = array<i64: 1, 8, 128>}]} {
    %c0 = arith.constant 0 : index
    %c0_0 = arith.constant 0 : index
    %c0_1 = arith.constant 0 : index
    %c0_2 = arith.constant 0 : index
    %0 = vector.load %arg2[%c0, %c0_0, %c0_1, %c0_2] : memref<1x1x12x128xbf16, #tpu.memory_space<vmem>>, vector<1x1x10x128xbf16>
    %1 = vector.shape_cast %0 : vector<1x1x10x128xbf16> to vector<10x128xbf16>
    %c0_3 = arith.constant 0 : index
    %c0_4 = arith.constant 0 : index
    %c1 = arith.constant 1 : index
    %c0_5 = arith.constant 0 : index
    %2 = vector.load %arg2[%c0_3, %c0_4, %c1, %c0_5] : memref<1x1x12x128xbf16, #tpu.memory_space<vmem>>, vector<1x1x10x128xbf16>
    %3 = vector.shape_cast %2 : vector<1x1x10x128xbf16> to vector<10x128xbf16>
    %c0_6 = arith.constant 0 : index
    %c0_7 = arith.constant 0 : index
    %c2 = arith.constant 2 : index
    %c0_8 = arith.constant 0 : index
    %4 = vector.load %arg2[%c0_6, %c0_7, %c2, %c0_8] : memref<1x1x12x128xbf16, #tpu.memory_space<vmem>>, vector<1x1x10x128xbf16>
    %5 = vector.shape_cast %4 : vector<1x1x10x128xbf16> to vector<10x128xbf16>
    %6 = tpu.concatenate %1, %3, %5 in 1 : vector<10x128xbf16>, vector<10x128xbf16>, vector<10x128xbf16> -> vector<10x384xbf16>
    %c0_9 = arith.constant 0 : index
    %c0_10 = arith.constant 0 : index
    %7 = vector.load %arg3[%c0_9, %c0_10] : memref<384x128xbf16, #tpu.memory_space<vmem>>, vector<384x128xbf16>
    %cst = arith.constant dense<0.000000e+00> : vector<10x128xf32>
    %8 = tpu.matmul %6, %7, %cst {dimension_numbers = #tpu.dot_dimension_numbers<[1], [0], [0], [1], [0, 0, 1, 1], [], []>} : vector<10x384xbf16>, vector<384x128xbf16>, vector<10x128xf32> -> vector<10x128xf32>
    %c0_11 = arith.constant 0 : index
    %c0_12 = arith.constant 0 : index
    %9 = vector.load %arg4[%c0_11, %c0_12] : memref<1x128xf32, #tpu.memory_space<vmem>>, vector<1x128xf32>
    %10 = vector.broadcast %9 : vector<1x128xf32> to vector<10x128xf32>
    %11 = arith.addf %8, %10 : vector<10x128xf32>
    %cst_13 = arith.constant 0.000000e+00 : f32
    %12 = vector.broadcast %cst_13 : f32 to vector<10x128xf32>
    %13 = arith.maximumf %11, %12 : vector<10x128xf32>
    %c8_i32 = arith.constant 8 : i32
    %14 = arith.muli %arg1, %c8_i32 : i32
    %c1_i32 = arith.constant 1 : i32
    %15 = arith.subi %14, %c1_i32 : i32
    %16 = tpu.iota {dimensions = array<i32: 0>} : vector<10x1xi32>
    %17 = vector.broadcast %15 : i32 to vector<10x1xi32>
    %18 = arith.addi %17, %16 : vector<10x1xi32>
    %c0_i32 = arith.constant 0 : i32
    %19 = vector.broadcast %c0_i32 : i32 to vector<10x1xi32>
    %20 = arith.cmpi sge, %18, %19 : vector<10x1xi32>
    %c16_i32 = arith.constant 16 : i32
    %21 = vector.broadcast %c16_i32 : i32 to vector<10x1xi32>
    %22 = arith.cmpi slt, %18, %21 : vector<10x1xi32>
    %23 = arith.andi %20, %22 : vector<10x1xi1>
    %cst_14 = arith.constant 0.000000e+00 : f32
    %24 = vector.shape_cast %23 : vector<10x1xi1> to vector<10x1xi1>
    %25 = vector.broadcast %24 : vector<10x1xi1> to vector<10x128xi1>
    %26 = vector.broadcast %cst_14 : f32 to vector<10x128xf32>
    %27 = arith.select %25, %13, %26 : vector<10x128xi1>, vector<10x128xf32>
    %28 = arith.truncf %27 : vector<10x128xf32> to vector<10x128xbf16>
    %29 = vector.extract_strided_slice %28 {offsets = [0, 0], sizes = [8, 128], strides = [1, 1]} : vector<10x128xbf16> to vector<8x128xbf16>
    %30 = vector.extract_strided_slice %28 {offsets = [1, 0], sizes = [8, 128], strides = [1, 1]} : vector<10x128xbf16> to vector<8x128xbf16>
    %31 = vector.extract_strided_slice %28 {offsets = [2, 0], sizes = [8, 128], strides = [1, 1]} : vector<10x128xbf16> to vector<8x128xbf16>
    %32 = tpu.concatenate %29, %30, %31 in 1 : vector<8x128xbf16>, vector<8x128xbf16>, vector<8x128xbf16> -> vector<8x384xbf16>
    %c0_15 = arith.constant 0 : index
    %c0_16 = arith.constant 0 : index
    %33 = vector.load %arg5[%c0_15, %c0_16] : memref<384x128xbf16, #tpu.memory_space<vmem>>, vector<384x128xbf16>
    %cst_17 = arith.constant dense<0.000000e+00> : vector<8x128xf32>
    %34 = tpu.matmul %32, %33, %cst_17 {dimension_numbers = #tpu.dot_dimension_numbers<[1], [0], [0], [1], [0, 0, 1, 1], [], []>} : vector<8x384xbf16>, vector<384x128xbf16>, vector<8x128xf32> -> vector<8x128xf32>
    %c0_18 = arith.constant 0 : index
    %c0_19 = arith.constant 0 : index
    %35 = vector.load %arg6[%c0_18, %c0_19] : memref<1x128xf32, #tpu.memory_space<vmem>>, vector<1x128xf32>
    %36 = vector.broadcast %35 : vector<1x128xf32> to vector<8x128xf32>
    %37 = arith.addf %34, %36 : vector<8x128xf32>
    %c0_20 = arith.constant 0 : index
    %c0_21 = arith.constant 0 : index
    %c2_22 = arith.constant 2 : index
    %c0_23 = arith.constant 0 : index
    %38 = vector.load %arg2[%c0_20, %c0_21, %c2_22, %c0_23] : memref<1x1x12x128xbf16, #tpu.memory_space<vmem>>, vector<1x1x8x128xbf16>
    %39 = vector.shape_cast %38 : vector<1x1x8x128xbf16> to vector<8x128xbf16>
    %40 = arith.extf %39 : vector<8x128xbf16> to vector<8x128xf32>
    %41 = arith.addf %37, %40 : vector<8x128xf32>
    %cst_24 = arith.constant 0.000000e+00 : f32
    %42 = vector.broadcast %cst_24 : f32 to vector<8x128xf32>
    %43 = arith.maximumf %41, %42 : vector<8x128xf32>
    %c0_25 = arith.constant 0 : index
    %c0_26 = arith.constant 0 : index
    %c0_27 = arith.constant 0 : index
    %44 = vector.load %arg7[%c0_25, %c0_26, %c0_27] : memref<1x8x128xf32, #tpu.memory_space<vmem>>, vector<1x8x128xf32>
    %45 = vector.shape_cast %44 : vector<1x8x128xf32> to vector<8x128xf32>
    %46 = vector.shape_cast %43 : vector<8x128xf32> to vector<1x8x128xf32>
    tpu.vector_store %arg7[%c0_25, %c0_26, %c0_27], %46 {strides = array<i32>} : memref<1x8x128xf32, #tpu.memory_space<vmem>>, vector<1x8x128xf32>,
    return
  }
  func.func @transform_0(%arg0: i32, %arg1: i32) -> (i32, i32, i32, i32) {
    %c0_i32 = arith.constant 0 : i32
    %c0_i32_0 = arith.constant 0 : i32
    %c0_i32_1 = arith.constant 0 : i32
    return %arg0, %arg1, %c0_i32, %c0_i32_0 : i32, i32, i32, i32
  }
  func.func @transform_1(%arg0: i32, %arg1: i32) -> (i32, i32) {
    %c0_i32 = arith.constant 0 : i32
    %c0_i32_0 = arith.constant 0 : i32
    %c0_i32_1 = arith.constant 0 : i32
    return %c0_i32, %c0_i32_0 : i32, i32
  }
  func.func @transform_2(%arg0: i32, %arg1: i32) -> (i32, i32) {
    %c0_i32 = arith.constant 0 : i32
    %c0_i32_0 = arith.constant 0 : i32
    %c0_i32_1 = arith.constant 0 : i32
    return %c0_i32, %c0_i32_0 : i32, i32
  }
  func.func @transform_3(%arg0: i32, %arg1: i32) -> (i32, i32) {
    %c0_i32 = arith.constant 0 : i32
    %c0_i32_0 = arith.constant 0 : i32
    %c0_i32_1 = arith.constant 0 : i32
    return %c0_i32, %c0_i32_0 : i32, i32
  }
  func.func @transform_4(%arg0: i32, %arg1: i32) -> (i32, i32) {
    %c0_i32 = arith.constant 0 : i32
    %c0_i32_0 = arith.constant 0 : i32
    %c0_i32_1 = arith.constant 0 : i32
    return %c0_i32, %c0_i32_0 : i32, i32
  }
  func.func @transform_5(%arg0: i32, %arg1: i32) -> (i32, i32, i32) {
    %c0_i32 = arith.constant 0 : i32
    %c0_i32_0 = arith.constant 0 : i32
    return %arg0, %arg1, %c0_i32 : i32, i32, i32
  }
}

</mosaic_0001>

<llo_original>
// kernel: tpu_custom_call.1
$region0: #{tpu_custom_call.1}
  #allocation0 [shape = 'u32[]', space=smem, size = 0x4, offset = 0x4, fixed_abs, tag = 'smem constant byte address 0x4 - core index']
  #allocation1 [shape = 'u32[144,128]{1,0:T(1,128)}', space=vmem, size = 0x12000, scoped, tag = 'internal scratch']
  %s0 = inlined_call_operand.vmem [shape: bf16[2,2,12,128], index: 0, kind: input, shape index: {}]
  %s1 = inlined_call_operand.hbm [shape: bf16[384,128], index: 1, kind: input, shape index: {}]
  %s2 = inlined_call_operand.vmem [shape: f32[1,128], index: 2, kind: input, shape index: {}]
  %s3 = inlined_call_operand.hbm [shape: bf16[384,128], index: 3, kind: input, shape index: {}]
  %s4 = inlined_call_operand.vmem [shape: f32[1,128], index: 4, kind: input, shape index: {}]
  %s5 = inlined_call_operand.hbm [shape: f32[2,16,128], index: 5, kind: output, shape index: {}]
  %s6 = sld [smem:[#allocation0]]
  $region61: #{tpu_custom_call.1} parent=0
    _
  %s8 = ssub.s32 1, %s6
  %s9 = scalar_select 0, %s8, %s6
  $region1: #{tpu_custom_call.1} parent=0
    #allocation2 [shape = 'u8[98304]{0}', space=vmem, size = 0x18000, scoped, tag = 'input window, operand 1, single buffered']
    #allocation3 [shape = 's32[2]{0}', space=sflag, size = 0x8, scoped, tag = 'scoped memory for tpu_custom_call.1']
    #allocation4 [shape = 's32[2]{0}', space=sflag, size = 0x8, scoped, tag = 'scoped memory for tpu_custom_call.1']
    #allocation5 [shape = 'u8[98304]{0}', space=vmem, size = 0x18000, scoped, tag = 'input window, operand 3, single buffered']
    #allocation6 [shape = 's32[1]{0}', space=sflag, size = 0x4, scoped, tag = 'scoped memory for tpu_custom_call.1']
    #allocation7 [shape = 'u8[8192]{0}', space=vmem, size = 0x2000, scoped, tag = 'output window, operand 0']
    %10 = vsyncpa [#allocation3], 0
    %11 = vsyncpa [#allocation6], 0
    %12 = vsyncpa [#allocation4], 0
    %s13 = scalar_lea.sflag [#allocation4], 1
    %14 = vsyncpa %s13, 0
    loop: start=0, step=1, limit=6
    $region2: #{tpu_custom_call.1} parent=1 // loop_pre_header
      _
    $region3: #{tpu_custom_call.1} parent=1 // loop_header
      %s16 = sphi 0, %s20
      %p17 = scmp.ge.s32.totalorder %s16, 6
      %s23 = sphi 0, %s35
      %s24 = sphi 0, %s31
      %s25 = sphi 0, %s23
      %s26 = sphi 0, %s24
      %s27 = sphi 0, %s25
      %s28 = sphi 0, %s26
      %s40 = sphi 0, %s42
      %s43 = sphi 0, %s40
      %s44 = sphi 0, %s43
      %s60 = sphi 0, %s44
      %s64 = sphi 0, %s64
      %s66 = sphi 0, %s64
      %s67 = sphi 0, %s66
      %s81 = sphi 0, %s67
      %s85 = sphi 0, %s85
      %s87 = sphi 0, %s85
      %s88 = sphi 0, %s87
      %s102 = sphi 0, %s88
      %s106 = sphi 0, %s106
      %s108 = sphi 0, %s106
      %s109 = sphi 0, %s108
      %s123 = sphi 0, %s109
      %s127 = sphi 0, %s127
      %s129 = sphi 0, %s127
      %s130 = sphi 0, %s129
      %s144 = sphi 0, %s130
      %s152 = sphi 0, %s154
      %s155 = sphi 0, %s152
      %s156 = sphi 0, %s155
      %s172 = sphi 0, %s156
    $region4: #{tpu_custom_call.1} parent=1 // loop_header_branch
      %19 = sbr.rel (%p17) target = $region8
    $region5: #{tpu_custom_call.1} parent=1 // loop_body
      %s21 = ssub.s32 %s16, 1
      %s22 = ssub.s32 %s16, 2
      %s29 = sadd.s32 1, %s24
      %p30 = scmp.ge.s32.totalorder %s29, 2
      %s31 = scalar_select %p30, 0, %s29
      %s32 = sadd.s32 1, %s23
      %s33 = scalar_select %p30, %s32, %s23
      %p34 = scmp.ge.s32.totalorder %s33, 2
      %s35 = scalar_select %p34, 0, %s33
      %s36 = ssub.s32 %s23, %s35
      %s37 = ssub.s32 %s24, %s31
      %s38 = sor.u32 %s36, %s37
      %p39 = scmp.eq.s32.totalorder %s38, 0
      %s41 = sadd.s32 %s40, 1
      %s42 = scalar_select %p39, %s40, %s41
      %p45 = pneg %p39
      %p46 = scmp.eq.s32.totalorder %s16, 3
      %p47 = por %p45, %p46
      %p48 = scmp.ne.s32.totalorder %s40, %s43
      %p49 = scmp.eq.s32.totalorder %s16, 0
      %p50 = por %p48, %p49
      %p51 = scmp.ne.s32.totalorder %s40, %s43
      %p52 = scmp.eq.s32.totalorder %s21, 3
      %p53 = por %p51, %p52
      %p54 = scmp.ne.s32.totalorder %s43, %s44
      %p55 = scmp.eq.s32.totalorder %s21, 0
      %p56 = por %p54, %p55
      %p57 = scmp.ne.s32.totalorder %s43, %s44
      %p58 = scmp.eq.s32.totalorder %s22, 3
      %p59 = por %p57, %p58
      %p61 = scmp.ne.s32.totalorder %s44, %s60
      %p62 = scmp.eq.s32.totalorder %s22, 0
      %p63 = por %p61, %p62
      %s65 = sadd.s32 %s64, 1
      %p68 = scmp.eq.s32.totalorder %s16, 3
      %p69 = scmp.ne.s32.totalorder %s64, %s66
      %p70 = scmp.eq.s32.totalorder %s16, 0
      %p71 = por %p69, %p70
      %p72 = scmp.ne.s32.totalorder %s64, %s66
      %p73 = scmp.eq.s32.totalorder %s21, 3
      %p74 = por %p72, %p73
      %p75 = scmp.ne.s32.totalorder %s66, %s67
      %p76 = scmp.eq.s32.totalorder %s21, 0
      %p77 = por %p75, %p76
      %p78 = scmp.ne.s32.totalorder %s66, %s67
      %p79 = scmp.eq.s32.totalorder %s22, 3
      %p80 = por %p78, %p79
      %p82 = scmp.ne.s32.totalorder %s67, %s81
      %p83 = scmp.eq.s32.totalorder %s22, 0
      %p84 = por %p82, %p83
      %s86 = sadd.s32 %s85, 1
      %p89 = scmp.eq.s32.totalorder %s16, 3
      %p90 = scmp.ne.s32.totalorder %s85, %s87
      %p91 = scmp.eq.s32.totalorder %s16, 0
      %p92 = por %p90, %p91
      %p93 = scmp.ne.s32.totalorder %s85, %s87
      %p94 = scmp.eq.s32.totalorder %s21, 3
      %p95 = por %p93, %p94
      %p96 = scmp.ne.s32.totalorder %s87, %s88
      %p97 = scmp.eq.s32.totalorder %s21, 0
      %p98 = por %p96, %p97
      %p99 = scmp.ne.s32.totalorder %s87, %s88
      %p100 = scmp.eq.s32.totalorder %s22, 3
      %p101 = por %p99, %p100
      %p103 = scmp.ne.s32.totalorder %s88, %s102
      %p104 = scmp.eq.s32.totalorder %s22, 0
      %p105 = por %p103, %p104
      %s107 = sadd.s32 %s106, 1
      %p110 = scmp.eq.s32.totalorder %s16, 3
      %p111 = scmp.ne.s32.totalorder %s106, %s108
      %p112 = scmp.eq.s32.totalorder %s16, 0
      %p113 = por %p111, %p112
      %p114 = scmp.ne.s32.totalorder %s106, %s108
      %p115 = scmp.eq.s32.totalorder %s21, 3
      %p116 = por %p114, %p115
      %p117 = scmp.ne.s32.totalorder %s108, %s109
      %p118 = scmp.eq.s32.totalorder %s21, 0
      %p119 = por %p117, %p118
      %p120 = scmp.ne.s32.totalorder %s108, %s109
      %p121 = scmp.eq.s32.totalorder %s22, 3
      %p122 = por %p120, %p121
      %p124 = scmp.ne.s32.totalorder %s109, %s123
      %p125 = scmp.eq.s32.totalorder %s22, 0
      %p126 = por %p124, %p125
      %s128 = sadd.s32 %s127, 1
      %p131 = scmp.eq.s32.totalorder %s16, 3
      %p132 = scmp.ne.s32.totalorder %s127, %s129
      %p133 = scmp.eq.s32.totalorder %s16, 0
      %p134 = por %p132, %p133
      %p135 = scmp.ne.s32.totalorder %s127, %s129
      %p136 = scmp.eq.s32.totalorder %s21, 3
      %p137 = por %p135, %p136
      %p138 = scmp.ne.s32.totalorder %s129, %s130
      %p139 = scmp.eq.s32.totalorder %s21, 0
      %p140 = por %p138, %p139
      %p141 = scmp.ne.s32.totalorder %s129, %s130
      %p142 = scmp.eq.s32.totalorder %s22, 3
      %p143 = por %p141, %p142
      %p145 = scmp.ne.s32.totalorder %s130, %s144
      %p146 = scmp.eq.s32.totalorder %s22, 0
      %p147 = por %p145, %p146
      %s148 = ssub.s32 %s23, %s35
      %s149 = ssub.s32 %s24, %s31
      %s150 = sor.u32 %s148, %s149
      %p151 = scmp.eq.s32.totalorder %s150, 0
      %s153 = sadd.s32 %s152, 1
      %s154 = scalar_select %p151, %s152, %s153
      %p157 = pneg %p151
      %p158 = scmp.eq.s32.totalorder %s16, 3
      %p159 = por %p157, %p158
      %p160 = scmp.ne.s32.totalorder %s152, %s155
      %p161 = scmp.eq.s32.totalorder %s16, 0
      %p162 = por %p160, %p161
      %p163 = scmp.ne.s32.totalorder %s152, %s155
      %p164 = scmp.eq.s32.totalorder %s21, 3
      %p165 = por %p163, %p164
      %p166 = scmp.ne.s32.totalorder %s155, %s156
      %p167 = scmp.eq.s32.totalorder %s21, 0
      %p168 = por %p166, %p167
      %p169 = scmp.ne.s32.totalorder %s155, %s156
      %p170 = scmp.eq.s32.totalorder %s22, 3
      %p171 = por %p169, %p170
      %p173 = scmp.ne.s32.totalorder %s156, %s172
      %p174 = scmp.eq.s32.totalorder %s22, 0
      %p175 = por %p173, %p174
      %p176 = scmp.le.s32.totalorder 1, %s16
      %p177 = scmp.lt.s32.totalorder %s16, 5
      %p178 = pnand %p176, %p177
      %p179 = pneg %p178
      // Predicated region
      $region9: #{tpu_custom_call.1} parent=5 // pred_check
        _
      $region10: #{tpu_custom_call.1} parent=5 // pred_check_branch
        %181 = sbr.rel (%p178) target = $region12
      $region11: #{tpu_custom_call.1} parent=5 // pred_region
        %s182 = ssub.s32 %s16, 1
        // Predicated region
        $region13: #{tpu_custom_call.1} parent=11 // pred_check
          %p183 = pneg %p77
        $region14: #{tpu_custom_call.1} parent=11 // pred_check_branch
          %185 = sbr.rel (%p183) target = $region16
        $region15: #{tpu_custom_call.1} parent=11 // pred_region
          %s187 = ssub.s32 3072, 3072
          %188 = vsyncadd [#allocation3], %s187
          %s189 = sshll.u32 [#allocation2], 4
          %s190 = int_to_ptr.vmem [resolvable:$true] %s189
          %195 = dma.hbm_to_vmem [thread:$0]  %s1, 3072, %s190, [#allocation3], 64, 64, 4
        $region16: #{tpu_custom_call.1} parent=11 // pred_fallthru
          _
        // Predicated region
        $region17: #{tpu_custom_call.1} parent=11 // pred_check
          %p196 = pneg %p98
        $region18: #{tpu_custom_call.1} parent=11 // pred_check_branch
          %198 = sbr.rel (%p196) target = $region20
        $region19: #{tpu_custom_call.1} parent=11 // pred_region
          _
        $region20: #{tpu_custom_call.1} parent=11 // pred_fallthru
          _
        // Predicated region
        $region21: #{tpu_custom_call.1} parent=11 // pred_check
          %p199 = pneg %p119
        $region22: #{tpu_custom_call.1} parent=11 // pred_check_branch
          %201 = sbr.rel (%p199) target = $region24
        $region23: #{tpu_custom_call.1} parent=11 // pred_region
          %s203 = ssub.s32 3072, 3072
          %204 = vsyncadd [#allocation6], %s203
          %s205 = sshll.u32 [#allocation5], 4
          %s206 = int_to_ptr.vmem [resolvable:$true] %s205
          %211 = dma.hbm_to_vmem [thread:$0]  %s3, 3072, %s206, [#allocation6], 64, 64, 4
        $region24: #{tpu_custom_call.1} parent=11 // pred_fallthru
          _
        // Predicated region
        $region25: #{tpu_custom_call.1} parent=11 // pred_check
          %p212 = pneg %p140
        $region26: #{tpu_custom_call.1} parent=11 // pred_check_branch
          %214 = sbr.rel (%p212) target = $region28
        $region27: #{tpu_custom_call.1} parent=11 // pred_region
          _
        $region28: #{tpu_custom_call.1} parent=11 // pred_fallthru
          _
      $region12: #{tpu_custom_call.1} parent=5 // pred_fallthru
        _
      %p215 = scmp.lt.s32.totalorder %s16, 4
      // Predicated region
      $region29: #{tpu_custom_call.1} parent=5 // pred_check
        %p216 = pneg %p215
      $region30: #{tpu_custom_call.1} parent=5 // pred_check_branch
        %218 = sbr.rel (%p216) target = $region32
      $region31: #{tpu_custom_call.1} parent=5 // pred_region
        // Predicated region
        $region33: #{tpu_custom_call.1} parent=31 // pred_check
          %p219 = pneg %p50
        $region34: #{tpu_custom_call.1} parent=31 // pred_check_branch
          %221 = sbr.rel (%p219) target = $region36
        $region35: #{tpu_custom_call.1} parent=31 // pred_region
          %p222 = scmp.lt.s32.totalorder %s23, 1
          %s223 = scalar_select %p222, %s23, 1
          %p224 = scmp.lt.s32.totalorder %s24, 1
          %s225 = scalar_select %p224, %s24, 1
          %s226 = smul.addr %s225, 2
          %s227 = smul.addr %s223, 4
          %s228 = sadd.s32 %s226, %s227
          %s229 = smul.addr %s228, 4
          %s230 = scalar_lea.vmem %s0, %s229
        $region36: #{tpu_custom_call.1} parent=31 // pred_fallthru
          _
      $region32: #{tpu_custom_call.1} parent=5 // pred_fallthru
        _
      %p231 = scmp.le.s32.totalorder 1, %s16
      %p232 = scmp.lt.s32.totalorder %s16, 5
      %p233 = pnand %p231, %p232
      %p234 = pneg %p233
      // Predicated region
      $region37: #{tpu_custom_call.1} parent=5 // pred_check
        _
      $region38: #{tpu_custom_call.1} parent=5 // pred_check_branch
        %236 = sbr.rel (%p233) target = $region40
      $region39: #{tpu_custom_call.1} parent=5 // pred_region
        %s237 = ssub.s32 %s16, 1
        // Predicated region
        $region41: #{tpu_custom_call.1} parent=39 // pred_check
          %p238 = pneg %p77
        $region42: #{tpu_custom_call.1} parent=39 // pred_check_branch
          %240 = sbr.rel (%p238) target = $region44
        $region43: #{tpu_custom_call.1} parent=39 // pred_region
          %241 = dma.done [#allocation3], 3072
        $region44: #{tpu_custom_call.1} parent=39 // pred_fallthru
          _
        // Predicated region
        $region45: #{tpu_custom_call.1} parent=39 // pred_check
          %p242 = pneg %p119
        $region46: #{tpu_custom_call.1} parent=39 // pred_check_branch
          %244 = sbr.rel (%p242) target = $region48
        $region47: #{tpu_custom_call.1} parent=39 // pred_region
          %245 = dma.done [#allocation6], 3072
        $region48: #{tpu_custom_call.1} parent=39 // pred_fallthru
          _
        %p246 = scmp.lt.s32.totalorder %s25, 1
        %s247 = scalar_select %p246, %s25, 1
        %p248 = scmp.lt.s32.totalorder %s26, 1
        %s249 = scalar_select %p248, %s26, 1
        %s250 = smul.addr %s249, 2
        %s251 = smul.addr %s247, 4
        %s252 = sadd.s32 %s250, %s251
        %s253 = smul.addr %s252, 4
        %s254 = scalar_lea.vmem %s0, %s253
        %p255 = pneg %p56
        %p256 = pneg %p53
        %p257 = pneg %p77
        %p258 = pneg %p74
        %p259 = pneg %p98
        %p260 = pneg %p95
        %p261 = pneg %p119
        %p262 = pneg %p116
        %p263 = pneg %p140
        %p264 = pneg %p137
        %p265 = pneg %p168
        %p266 = pneg %p165
        %s267 = sand.u32 %s155, 1
        %s268 = scalar_lea.sflag [#allocation4], %s267
        %s269 = sand.u32 %s155, 1
        %s270 = smul.addr %s269, 8
        %s271 = scalar_lea.vmem [#allocation7], %s270
        %p272 = scmp.lt.s32.totalorder %s25, 1
        %s273 = scalar_select %p272, %s25, 1
        %p274 = scmp.lt.s32.totalorder %s26, 1
        %s275 = scalar_select %p274, %s26, 1
        %s276 = smul.addr %s275, 2
        %s277 = smul.addr %s273, 4
        %s278 = sadd.s32 %s276, %s277
        %s279 = smul.addr %s278, 4
        %s280 = scalar_lea.vmem %s0, %s279
        %v282 = vld [vmem:[%s280] sm:$0xf]
        %v283 = vld [vmem:[%s280 + $0x4] sm:$0x1]
        %v284 = vld [vmem:[%s280 + $0x4] sm:$0x3]
        %v285 = vld [vmem:[%s280] sm:$0xe]
        %v288 = vunpack.c.l.b16 %v282
        %v289 = vunpack.c.l.b16 %v283
        %v290 = vpack.c.b16 %v289, %v288
        %v293 = vunpack.c.l.b16 %v284
        %v294 = vpack.c.b16 %v293, %v288
        %v296 = vshrl.u32 %v294, 16
        %v298 = vshll.u32 %v294, 16
        %v300 = vrot.slane %v298, 1
        %v301 = vor.u32 %v296, %v300
        %v304 = vunpack.c.l.b16 %v285
        %v305 = vpack.c.b16 %v293, %v304
        %v306 = vrot.slane %v305, 1
        %v308 = vld [vmem:[#allocation2] sm:$0xf]
        %v309 = vld [vmem:[#allocation2 + $0x4] sm:$0xf]
        %v310 = vld [vmem:[#allocation2 + $0x8] sm:$0xf]
        %v311 = vld [vmem:[#allocation2 + $0xc] sm:$0xf]
        %v312 = vld [vmem:[#allocation2 + $0x10] sm:$0xf]
        %v313 = vld [vmem:[#allocation2 + $0x14] sm:$0xf]
        %v314 = vld [vmem:[#allocation2 + $0x18] sm:$0xf]
        %v315 = vld [vmem:[#allocation2 + $0x1c] sm:$0xf]
        %v316 = vld [vmem:[#allocation2 + $0x20] sm:$0xf]
        %v317 = vld [vmem:[#allocation2 + $0x24] sm:$0xf]
        %v318 = vld [vmem:[#allocation2 + $0x28] sm:$0xf]
        %v319 = vld [vmem:[#allocation2 + $0x2c] sm:$0xf]
        %v320 = vld [vmem:[#allocation2 + $0x30] sm:$0xf]
        %v321 = vld [vmem:[#allocation2 + $0x34] sm:$0xf]
        %v322 = vld [vmem:[#allocation2 + $0x38] sm:$0xf]
        %v323 = vld [vmem:[#allocation2 + $0x3c] sm:$0xf]
        %v324 = vld [vmem:[#allocation2 + $0x40] sm:$0xf]
        %v325 = vld [vmem:[#allocation2 + $0x44] sm:$0xf]
        %v326 = vld [vmem:[#allocation2 + $0x48] sm:$0xf]
        %v327 = vld [vmem:[#allocation2 + $0x4c] sm:$0xf]
        %v328 = vld [vmem:[#allocation2 + $0x50] sm:$0xf]
        %v329 = vld [vmem:[#allocation2 + $0x54] sm:$0xf]
        %v330 = vld [vmem:[#allocation2 + $0x58] sm:$0xf]
        %v331 = vld [vmem:[#allocation2 + $0x5c] sm:$0xf]
        %v332 = vld [vmem:[#allocation2 + $0x60] sm:$0xf]
        %v333 = vld [vmem:[#allocation2 + $0x64] sm:$0xf]
        %v334 = vld [vmem:[#allocation2 + $0x68] sm:$0xf]
        %v335 = vld [vmem:[#allocation2 + $0x6c] sm:$0xf]
        %v336 = vld [vmem:[#allocation2 + $0x70] sm:$0xf]
        %v337 = vld [vmem:[#allocation2 + $0x74] sm:$0xf]
        %v338 = vld [vmem:[#allocation2 + $0x78] sm:$0xf]
        %v339 = vld [vmem:[#allocation2 + $0x7c] sm:$0xf]
        %v340 = vld [vmem:[#allocation2 + $0x80] sm:$0xf]
        %v341 = vld [vmem:[#allocation2 + $0x84] sm:$0xf]
        %v342 = vld [vmem:[#allocation2 + $0x88] sm:$0xf]
        %v343 = vld [vmem:[#allocation2 + $0x8c] sm:$0xf]
        %v344 = vld [vmem:[#allocation2 + $0x90] sm:$0xf]
        %v345 = vld [vmem:[#allocation2 + $0x94] sm:$0xf]
        %v346 = vld [vmem:[#allocation2 + $0x98] sm:$0xf]
        %v347 = vld [vmem:[#allocation2 + $0x9c] sm:$0xf]
        %v348 = vld [vmem:[#allocation2 + $0xa0] sm:$0xf]
        %v349 = vld [vmem:[#allocation2 + $0xa4] sm:$0xf]
        %v350 = vld [vmem:[#allocation2 + $0xa8] sm:$0xf]
        %v351 = vld [vmem:[#allocation2 + $0xac] sm:$0xf]
        %v352 = vld [vmem:[#allocation2 + $0xb0] sm:$0xf]
        %v353 = vld [vmem:[#allocation2 + $0xb4] sm:$0xf]
        %v354 = vld [vmem:[#allocation2 + $0xb8] sm:$0xf]
        %v355 = vld [vmem:[#allocation2 + $0xbc] sm:$0xf]
        %v356 = vld [vmem:[%s2] sm:$0x1]
        %v358 = vlaneseq
        %v359 = vshrl.u32 %v358, 7
        %v360 = vsub.s32 0, %v359
        %v361 = vrot.slane %v356, %v360
        %v411 = vunpack.c.l.b16 %v308
        %v412 = vunpack.c.l.b16 %v309
        %v413 = vunpack.c.l.b16 %v310
        %v414 = vunpack.c.l.b16 %v311
        %v415 = vunpack.c.l.b16 %v312
        %v416 = vunpack.c.l.b16 %v313
        %v417 = vunpack.c.l.b16 %v314
        %v418 = vunpack.c.l.b16 %v315
        %v419 = vunpack.c.l.b16 %v316
        %v420 = vunpack.c.l.b16 %v317
        %v421 = vunpack.c.l.b16 %v318
        %v422 = vunpack.c.l.b16 %v319
        %v423 = vunpack.c.l.b16 %v320
        %v424 = vunpack.c.l.b16 %v321
        %v425 = vunpack.c.l.b16 %v322
        %v426 = vunpack.c.l.b16 %v323
        %v427 = vunpack.c.l.b16 %v324
        %v428 = vunpack.c.l.b16 %v325
        %v429 = vunpack.c.l.b16 %v326
        %v430 = vunpack.c.l.b16 %v327
        %v431 = vunpack.c.l.b16 %v328
        %v432 = vunpack.c.l.b16 %v329
        %v433 = vunpack.c.l.b16 %v330
        %v434 = vunpack.c.l.b16 %v331
        %v435 = vunpack.c.l.b16 %v332
        %v436 = vunpack.c.l.b16 %v333
        %v437 = vunpack.c.l.b16 %v334
        %v438 = vunpack.c.l.b16 %v335
        %v439 = vunpack.c.l.b16 %v336
        %v440 = vunpack.c.l.b16 %v337
        %v441 = vunpack.c.l.b16 %v338
        %v442 = vunpack.c.l.b16 %v339
        %v443 = vunpack.c.l.b16 %v340
        %v444 = vunpack.c.l.b16 %v341
        %v445 = vunpack.c.l.b16 %v342
        %v446 = vunpack.c.l.b16 %v343
        %v447 = vunpack.c.l.b16 %v344
        %v448 = vunpack.c.l.b16 %v345
        %v449 = vunpack.c.l.b16 %v346
        %v450 = vunpack.c.l.b16 %v347
        %v451 = vunpack.c.l.b16 %v348
        %v452 = vunpack.c.l.b16 %v349
        %v453 = vunpack.c.l.b16 %v350
        %v454 = vunpack.c.l.b16 %v351
        %v455 = vunpack.c.l.b16 %v352
        %v456 = vunpack.c.l.b16 %v353
        %v457 = vunpack.c.l.b16 %v354
        %v458 = vunpack.c.l.b16 %v355
        %v459 = vpack.c.b16 %v412, %v411
        %v460 = vpack.c.b16 %v414, %v413
        %v461 = vpack.c.b16 %v416, %v415
        %v462 = vpack.c.b16 %v418, %v417
        %v463 = vpack.c.b16 %v420, %v419
        %v464 = vpack.c.b16 %v422, %v421
        %v465 = vpack.c.b16 %v424, %v423
        %v466 = vpack.c.b16 %v426, %v425
        %v467 = vpack.c.b16 %v428, %v427
        %v468 = vpack.c.b16 %v430, %v429
        %v469 = vpack.c.b16 %v432, %v431
        %v470 = vpack.c.b16 %v434, %v433
        %v471 = vpack.c.b16 %v436, %v435
        %v472 = vpack.c.b16 %v438, %v437
        %v473 = vpack.c.b16 %v440, %v439
        %v474 = vpack.c.b16 %v442, %v441
        %v475 = vpack.c.b16 %v444, %v443
        %v476 = vpack.c.b16 %v446, %v445
        %v477 = vpack.c.b16 %v448, %v447
        %v478 = vpack.c.b16 %v450, %v449
        %v479 = vpack.c.b16 %v452, %v451
        %v480 = vpack.c.b16 %v454, %v453
        %v481 = vpack.c.b16 %v456, %v455
        %v482 = vpack.c.b16 %v458, %v457
        %507 = vmatprep.subr.bf16.mxu0 0
        %508 = vmatpush1.bf16.msra.mxu0 %v459
        %509 = vmatprep.subr.bf16.mxu0 0
        %510 = vmatpush1.bf16.msra.mxu0 %v460
        %511 = vmatprep.subr.bf16.mxu0 0
        %512 = vmatpush1.bf16.msra.mxu0 %v461
        %513 = vmatprep.subr.bf16.mxu0 0
        %514 = vmatpush1.bf16.msra.mxu0 %v462
        %515 = vmatprep.subr.bf16.mxu0 0
        %516 = vmatpush1.bf16.msra.mxu0 %v463
        %517 = vmatprep.subr.bf16.mxu0 0
        %518 = vmatpush1.bf16.msra.mxu0 %v464
        %519 = vmatprep.subr.bf16.mxu0 0
        %520 = vmatpush1.bf16.msra.mxu0 %v465
        %521 = vmatprep.subr.bf16.mxu0 0
        %522 = vmatpush1.bf16.msra.mxu0 %v466
        %523 = vmatprep.subr.bf16.mxu0 0
        %524 = vmatpush1.bf16.msra.mxu0 %v467
        %525 = vmatprep.subr.bf16.mxu0 0
        %526 = vmatpush1.bf16.msra.mxu0 %v468
        %527 = vmatprep.subr.bf16.mxu0 0
        %528 = vmatpush1.bf16.msra.mxu0 %v469
        %529 = vmatprep.subr.bf16.mxu0 0
        %530 = vmatpush1.bf16.msra.mxu0 %v470
        %531 = vmatprep.subr.bf16.mxu0 0
        %532 = vmatpush1.bf16.msra.mxu0 %v471
        %533 = vmatprep.subr.bf16.mxu0 0
        %534 = vmatpush1.bf16.msra.mxu0 %v472
        %535 = vmatprep.subr.bf16.mxu0 0
        %536 = vmatpush1.bf16.msra.mxu0 %v473
        %537 = vmatprep.subr.bf16.mxu0 0
        %538 = vmatpush1.bf16.msra.mxu0 %v474
        %539 = vmatprep.mubr.bf16.mxu0 %v301
        %540 = vmatmul.mubr.bf16.gmra.mrb[0].mxu0 %v290
        %v541 = vpop.f32.mrb[0].mxu0
        %v542 = vadd.f32 %v361, %v541
        %v543 = vpop.f32.mrb[0].mxu0
        %v544 = vpop.f32.mrb[0].mxu0
        %v545 = vadd.f32 %v361, %v544
        %v546 = vpop.f32.mrb[0].mxu0
        %547 = vdwg.mxu0
        %548 = vmatprep.subr.bf16.mxu0 0
        %549 = vmatpush1.bf16.msra.mxu0 %v475
        %550 = vmatprep.subr.bf16.mxu0 0
        %551 = vmatpush1.bf16.msra.mxu0 %v476
        %552 = vmatprep.subr.bf16.mxu0 0
        %553 = vmatpush1.bf16.msra.mxu0 %v477
        %554 = vmatprep.subr.bf16.mxu0 0
        %555 = vmatpush1.bf16.msra.mxu0 %v478
        %556 = vmatprep.subr.bf16.mxu0 0
        %557 = vmatpush1.bf16.msra.mxu0 %v479
        %558 = vmatprep.subr.bf16.mxu0 0
        %559 = vmatpush1.bf16.msra.mxu0 %v480
        %560 = vmatprep.subr.bf16.mxu0 0
        %561 = vmatpush1.bf16.msra.mxu0 %v481
        %562 = vmatprep.subr.bf16.mxu0 0
        %563 = vmatpush1.bf16.msra.mxu0 %v482
        %564 = vmatprep.subr.bf16.mxu0 0
        %565 = vmatpush1.bf16.msra.mxu0 0
        %566 = vmatprep.subr.bf16.mxu0 0
        %567 = vmatpush1.bf16.msra.mxu0 0
        %568 = vmatprep.subr.bf16.mxu0 0
        %569 = vmatpush1.bf16.msra.mxu0 0
        %570 = vmatprep.subr.bf16.mxu0 0
        %571 = vmatpush1.bf16.msra.mxu0 0
        %572 = vmatprep.subr.bf16.mxu0 0
        %573 = vmatpush1.bf16.msra.mxu0 0
        %574 = vmatprep.subr.bf16.mxu0 0
        %575 = vmatpush1.bf16.msra.mxu0 0
        %576 = vmatprep.subr.bf16.mxu0 0
        %577 = vmatpush1.bf16.msra.mxu0 0
        %578 = vmatprep.subr.bf16.mxu0 0
        %579 = vmatpush1.bf16.msra.mxu0 0
        %580 = vmatprep.mubr.bf16.mxu0 0
        %581 = vmatmul.mubr.bf16.gmra.mrb[0].mxu0 %v306
        %v582 = vpop.f32.mrb[0].mxu0
        %v583 = vadd.f32 %v542, %v582
        %v584 = vpop.f32.mrb[0].mxu0
        %v585 = vpop.f32.mrb[0].mxu0
        %v586 = vadd.f32 %v545, %v585
        %v587 = vpop.f32.mrb[0].mxu0
        %588 = vdwg.mxu0
        %v589 = vmax.f32 %v583, 0.0
        %v590 = vmax.f32 %v586, 0.0
        %s591 = smul.u32 %s26, 8
        %s592 = ssub.s32 %s591, 1
        %v593 = vlaneseq
        %v594 = vshrl.u32 %v593, 7
        %v595 = vadd.s32 %v594, 8
        %v596 = vstv %s592
        %v597 = vadd.s32 %v596, %v594
        %v598 = vadd.s32 %v596, %v595
        %vm599 = vcmp.ge.s32.totalorder %v597, 0
        %vm600 = vcmp.ge.s32.totalorder %v598, 0
        %vm601 = vcmp.lt.s32.totalorder %v597, 16
        %vm602 = vcmp.lt.s32.totalorder %v598, 16
        %vm603 = vmand %vm599, %vm601
        %vm604 = vmand %vm600, %vm602
        %v605 = vsel %vm603, 1, 0
        %v606 = vsel %vm604, 1, 0
        %vm607 = vcmp.eq.s32.totalorder %v605, 1
        %vm608 = vcmp.eq.s32.totalorder %v606, 1
        %v609 = vsel %vm607, %v589, 0.0
        %v610 = vsel %vm608, %v590, 0.0
        %v611 = vpack.c.bf16 %v610, %v609
        %v613 = vshrl.u32 %v611, 16
        %v615 = vshll.u32 %v611, 16
        %v617 = vrot.slane %v615, 1
        %v618 = vor.u32 %v613, %v617
        %v621 = vrot.slane %v611, 1
        %v623 = vld [vmem:[#allocation5] sm:$0xf]
        %v624 = vld [vmem:[#allocation5 + $0x4] sm:$0xf]
        %v625 = vld [vmem:[#allocation5 + $0x8] sm:$0xf]
        %v626 = vld [vmem:[#allocation5 + $0xc] sm:$0xf]
        %v627 = vld [vmem:[#allocation5 + $0x10] sm:$0xf]
        %v628 = vld [vmem:[#allocation5 + $0x14] sm:$0xf]
        %v629 = vld [vmem:[#allocation5 + $0x18] sm:$0xf]
        %v630 = vld [vmem:[#allocation5 + $0x1c] sm:$0xf]
        %v631 = vld [vmem:[#allocation5 + $0x20] sm:$0xf]
        %v632 = vld [vmem:[#allocation5 + $0x24] sm:$0xf]
        %v633 = vld [vmem:[#allocation5 + $0x28] sm:$0xf]
        %v634 = vld [vmem:[#allocation5 + $0x2c] sm:$0xf]
        %v635 = vld [vmem:[#allocation5 + $0x30] sm:$0xf]
        %v636 = vld [vmem:[#allocation5 + $0x34] sm:$0xf]
        %v637 = vld [vmem:[#allocation5 + $0x38] sm:$0xf]
        %v638 = vld [vmem:[#allocation5 + $0x3c] sm:$0xf]
        %v639 = vld [vmem:[#allocation5 + $0x40] sm:$0xf]
        %v640 = vld [vmem:[#allocation5 + $0x44] sm:$0xf]
        %v641 = vld [vmem:[#allocation5 + $0x48] sm:$0xf]
        %v642 = vld [vmem:[#allocation5 + $0x4c] sm:$0xf]
        %v643 = vld [vmem:[#allocation5 + $0x50] sm:$0xf]
        %v644 = vld [vmem:[#allocation5 + $0x54] sm:$0xf]
        %v645 = vld [vmem:[#allocation5 + $0x58] sm:$0xf]
        %v646 = vld [vmem:[#allocation5 + $0x5c] sm:$0xf]
        %v647 = vld [vmem:[#allocation5 + $0x60] sm:$0xf]
        %v648 = vld [vmem:[#allocation5 + $0x64] sm:$0xf]
        %v649 = vld [vmem:[#allocation5 + $0x68] sm:$0xf]
        %v650 = vld [vmem:[#allocation5 + $0x6c] sm:$0xf]
        %v651 = vld [vmem:[#allocation5 + $0x70] sm:$0xf]
        %v652 = vld [vmem:[#allocation5 + $0x74] sm:$0xf]
        %v653 = vld [vmem:[#allocation5 + $0x78] sm:$0xf]
        %v654 = vld [vmem:[#allocation5 + $0x7c] sm:$0xf]
        %v655 = vld [vmem:[#allocation5 + $0x80] sm:$0xf]
        %v656 = vld [vmem:[#allocation5 + $0x84] sm:$0xf]
        %v657 = vld [vmem:[#allocation5 + $0x88] sm:$0xf]
        %v658 = vld [vmem:[#allocation5 + $0x8c] sm:$0xf]
        %v659 = vld [vmem:[#allocation5 + $0x90] sm:$0xf]
        %v660 = vld [vmem:[#allocation5 + $0x94] sm:$0xf]
        %v661 = vld [vmem:[#allocation5 + $0x98] sm:$0xf]
        %v662 = vld [vmem:[#allocation5 + $0x9c] sm:$0xf]
        %v663 = vld [vmem:[#allocation5 + $0xa0] sm:$0xf]
        %v664 = vld [vmem:[#allocation5 + $0xa4] sm:$0xf]
        %v665 = vld [vmem:[#allocation5 + $0xa8] sm:$0xf]
        %v666 = vld [vmem:[#allocation5 + $0xac] sm:$0xf]
        %v667 = vld [vmem:[#allocation5 + $0xb0] sm:$0xf]
        %v668 = vld [vmem:[#allocation5 + $0xb4] sm:$0xf]
        %v669 = vld [vmem:[#allocation5 + $0xb8] sm:$0xf]
        %v670 = vld [vmem:[#allocation5 + $0xbc] sm:$0xf]
        %v671 = vld [vmem:[%s4] sm:$0x1]
        %v673 = vlaneseq
        %v674 = vshrl.u32 %v673, 7
        %v675 = vsub.s32 0, %v674
        %v676 = vrot.slane %v671, %v675
        %v726 = vunpack.c.l.b16 %v623
        %v727 = vunpack.c.l.b16 %v624
        %v728 = vunpack.c.l.b16 %v625
        %v729 = vunpack.c.l.b16 %v626
        %v730 = vunpack.c.l.b16 %v627
        %v731 = vunpack.c.l.b16 %v628
        %v732 = vunpack.c.l.b16 %v629
        %v733 = vunpack.c.l.b16 %v630
        %v734 = vunpack.c.l.b16 %v631
        %v735 = vunpack.c.l.b16 %v632
        %v736 = vunpack.c.l.b16 %v633
        %v737 = vunpack.c.l.b16 %v634
        %v738 = vunpack.c.l.b16 %v635
        %v739 = vunpack.c.l.b16 %v636
        %v740 = vunpack.c.l.b16 %v637
        %v741 = vunpack.c.l.b16 %v638
        %v742 = vunpack.c.l.b16 %v639
        %v743 = vunpack.c.l.b16 %v640
        %v744 = vunpack.c.l.b16 %v641
        %v745 = vunpack.c.l.b16 %v642
        %v746 = vunpack.c.l.b16 %v643
        %v747 = vunpack.c.l.b16 %v644
        %v748 = vunpack.c.l.b16 %v645
        %v749 = vunpack.c.l.b16 %v646
        %v750 = vunpack.c.l.b16 %v647
        %v751 = vunpack.c.l.b16 %v648
        %v752 = vunpack.c.l.b16 %v649
        %v753 = vunpack.c.l.b16 %v650
        %v754 = vunpack.c.l.b16 %v651
        %v755 = vunpack.c.l.b16 %v652
        %v756 = vunpack.c.l.b16 %v653
        %v757 = vunpack.c.l.b16 %v654
        %v758 = vunpack.c.l.b16 %v655
        %v759 = vunpack.c.l.b16 %v656
        %v760 = vunpack.c.l.b16 %v657
        %v761 = vunpack.c.l.b16 %v658
        %v762 = vunpack.c.l.b16 %v659
        %v763 = vunpack.c.l.b16 %v660
        %v764 = vunpack.c.l.b16 %v661
        %v765 = vunpack.c.l.b16 %v662
        %v766 = vunpack.c.l.b16 %v663
        %v767 = vunpack.c.l.b16 %v664
        %v768 = vunpack.c.l.b16 %v665
        %v769 = vunpack.c.l.b16 %v666
        %v770 = vunpack.c.l.b16 %v667
        %v771 = vunpack.c.l.b16 %v668
        %v772 = vunpack.c.l.b16 %v669
        %v773 = vunpack.c.l.b16 %v670
        %v774 = vpack.c.b16 %v727, %v726
        %v775 = vpack.c.b16 %v729, %v728
        %v776 = vpack.c.b16 %v731, %v730
        %v777 = vpack.c.b16 %v733, %v732
        %v778 = vpack.c.b16 %v735, %v734
        %v779 = vpack.c.b16 %v737, %v736
        %v780 = vpack.c.b16 %v739, %v738
        %v781 = vpack.c.b16 %v741, %v740
        %v782 = vpack.c.b16 %v743, %v742
        %v783 = vpack.c.b16 %v745, %v744
        %v784 = vpack.c.b16 %v747, %v746
        %v785 = vpack.c.b16 %v749, %v748
        %v786 = vpack.c.b16 %v751, %v750
        %v787 = vpack.c.b16 %v753, %v752
        %v788 = vpack.c.b16 %v755, %v754
        %v789 = vpack.c.b16 %v757, %v756
        %v790 = vpack.c.b16 %v759, %v758
        %v791 = vpack.c.b16 %v761, %v760
        %v792 = vpack.c.b16 %v763, %v762
        %v793 = vpack.c.b16 %v765, %v764
        %v794 = vpack.c.b16 %v767, %v766
        %v795 = vpack.c.b16 %v769, %v768
        %v796 = vpack.c.b16 %v771, %v770
        %v797 = vpack.c.b16 %v773, %v772
        %822 = vmatprep.subr.bf16.mxu0 0
        %823 = vmatpush1.bf16.msra.mxu0 %v774
        %824 = vmatprep.subr.bf16.mxu0 0
        %825 = vmatpush1.bf16.msra.mxu0 %v775
        %826 = vmatprep.subr.bf16.mxu0 0
        %827 = vmatpush1.bf16.msra.mxu0 %v776
        %828 = vmatprep.subr.bf16.mxu0 0
        %829 = vmatpush1.bf16.msra.mxu0 %v777
        %830 = vmatprep.subr.bf16.mxu0 0
        %831 = vmatpush1.bf16.msra.mxu0 %v778
        %832 = vmatprep.subr.bf16.mxu0 0
        %833 = vmatpush1.bf16.msra.mxu0 %v779
        %834 = vmatprep.subr.bf16.mxu0 0
        %835 = vmatpush1.bf16.msra.mxu0 %v780
        %836 = vmatprep.subr.bf16.mxu0 0
        %837 = vmatpush1.bf16.msra.mxu0 %v781
        %838 = vmatprep.subr.bf16.mxu0 0
        %839 = vmatpush1.bf16.msra.mxu0 %v782
        %840 = vmatprep.subr.bf16.mxu0 0
        %841 = vmatpush1.bf16.msra.mxu0 %v783
        %842 = vmatprep.subr.bf16.mxu0 0
        %843 = vmatpush1.bf16.msra.mxu0 %v784
        %844 = vmatprep.subr.bf16.mxu0 0
        %845 = vmatpush1.bf16.msra.mxu0 %v785
        %846 = vmatprep.subr.bf16.mxu0 0
        %847 = vmatpush1.bf16.msra.mxu0 %v786
        %848 = vmatprep.subr.bf16.mxu0 0
        %849 = vmatpush1.bf16.msra.mxu0 %v787
        %850 = vmatprep.subr.bf16.mxu0 0
        %851 = vmatpush1.bf16.msra.mxu0 %v788
        %852 = vmatprep.subr.bf16.mxu0 0
        %853 = vmatpush1.bf16.msra.mxu0 %v789
        %854 = vmatprep.mubr.bf16.mxu0 %v618
        %855 = vmatmul.mubr.bf16.gmra.mrb[0].mxu0 %v611
        %v856 = vpop.f32.mrb[0].mxu0
        %v857 = vadd.f32 %v676, %v856
        %v858 = vpop.f32.mrb[0].mxu0
        %v859 = vpop.f32.mrb[0].mxu0
        %v860 = vpop.f32.mrb[0].mxu0
        %861 = vdwg.mxu0
        %862 = vmatprep.subr.bf16.mxu0 0
        %863 = vmatpush1.bf16.msra.mxu0 %v790
        %864 = vmatprep.subr.bf16.mxu0 0
        %865 = vmatpush1.bf16.msra.mxu0 %v791
        %866 = vmatprep.subr.bf16.mxu0 0
        %867 = vmatpush1.bf16.msra.mxu0 %v792
        %868 = vmatprep.subr.bf16.mxu0 0
        %869 = vmatpush1.bf16.msra.mxu0 %v793
        %870 = vmatprep.subr.bf16.mxu0 0
        %871 = vmatpush1.bf16.msra.mxu0 %v794
        %872 = vmatprep.subr.bf16.mxu0 0
        %873 = vmatpush1.bf16.msra.mxu0 %v795
        %874 = vmatprep.subr.bf16.mxu0 0
        %875 = vmatpush1.bf16.msra.mxu0 %v796
        %876 = vmatprep.subr.bf16.mxu0 0
        %877 = vmatpush1.bf16.msra.mxu0 %v797
        %878 = vmatprep.subr.bf16.mxu0 0
        %879 = vmatpush1.bf16.msra.mxu0 0
        %880 = vmatprep.subr.bf16.mxu0 0
        %881 = vmatpush1.bf16.msra.mxu0 0
        %882 = vmatprep.subr.bf16.mxu0 0
        %883 = vmatpush1.bf16.msra.mxu0 0
        %884 = vmatprep.subr.bf16.mxu0 0
        %885 = vmatpush1.bf16.msra.mxu0 0
        %886 = vmatprep.subr.bf16.mxu0 0
        %887 = vmatpush1.bf16.msra.mxu0 0
        %888 = vmatprep.subr.bf16.mxu0 0
        %889 = vmatpush1.bf16.msra.mxu0 0
        %890 = vmatprep.subr.bf16.mxu0 0
        %891 = vmatpush1.bf16.msra.mxu0 0
        %892 = vmatprep.subr.bf16.mxu0 0
        %893 = vmatpush1.bf16.msra.mxu0 0
        %894 = vmatprep.mubr.bf16.mxu0 0
        %895 = vmatmul.mubr.bf16.gmra.mrb[0].mxu0 %v621
        %v896 = vpop.f32.mrb[0].mxu0
        %v897 = vadd.f32 %v857, %v896
        %v898 = vpop.f32.mrb[0].mxu0
        %v899 = vpop.f32.mrb[0].mxu0
        %v900 = vpop.f32.mrb[0].mxu0
        %901 = vdwg.mxu0
        %v902 = vunpack.c.l.bf16 %v285
        %v903 = vunpack.c.l.bf16 %v283
        %vm906 = vcmask 1045504
        %v907 = vrot.slane %v902, 2
        %v908 = vrot.slane %v903, 2
        %v909 = vsel %vm906, %v907, %v908
        %v911 = vadd.f32 %v897, %v909
        %v912 = vmax.f32 %v911, 0.0
        %913 = vst [vmem:[%s271] sm:$0xff] %v912
        %s914 = sand.u32 %s155, 1
        %s915 = scalar_lea.sflag [#allocation4], %s914
        %s916 = sand.u32 %s155, 1
        %s917 = smul.addr %s916, 8
        %s918 = scalar_lea.vmem [#allocation7], %s917
        // Predicated region
        $region49: #{tpu_custom_call.1} parent=39 // pred_check
          %p919 = pneg %p165
        $region50: #{tpu_custom_call.1} parent=39 // pred_check_branch
          %921 = sbr.rel (%p919) target = $region52
        $region51: #{tpu_custom_call.1} parent=39 // pred_region
          %s923 = ssub.s32 128, 128
          %924 = vsyncadd %s915, %s923
          %s925 = smul.addr %s25, 2
          %s926 = sadd.s32 %s26, %s925
          %s927 = smul.addr %s926, 128
          %s928 = scalar_lea.hbm %s5, %s927
          %s930 = sshll.u32 %s918, 4
          %s931 = int_to_ptr.vmem [resolvable:$true] %s930
          %933 = dma.vmem_to_hbm [thread:$0]  %s931, 128, %s928, %s915
        $region52: #{tpu_custom_call.1} parent=39 // pred_fallthru
          _
      $region40: #{tpu_custom_call.1} parent=5 // pred_fallthru
        _
      %p934 = scmp.le.s32.totalorder 2, %s16
      // Predicated region
      $region53: #{tpu_custom_call.1} parent=5 // pred_check
        %p935 = pneg %p934
      $region54: #{tpu_custom_call.1} parent=5 // pred_check_branch
        %937 = sbr.rel (%p935) target = $region56
      $region55: #{tpu_custom_call.1} parent=5 // pred_region
        %s938 = ssub.s32 %s16, 2
        // Predicated region
        $region57: #{tpu_custom_call.1} parent=55 // pred_check
          %p939 = pneg %p171
        $region58: #{tpu_custom_call.1} parent=55 // pred_check_branch
          %941 = sbr.rel (%p939) target = $region60
        $region59: #{tpu_custom_call.1} parent=55 // pred_region
          %s942 = sand.u32 %s156, 1
          %s943 = scalar_lea.sflag [#allocation4], %s942
          %s944 = sand.u32 %s156, 1
          %s945 = smul.addr %s944, 8
          %s946 = scalar_lea.vmem [#allocation7], %s945
          %947 = dma.done %s943, 128
        $region60: #{tpu_custom_call.1} parent=55 // pred_fallthru
          _
      $region56: #{tpu_custom_call.1} parent=5 // pred_fallthru
        _
    $region6: #{tpu_custom_call.1} parent=1 // loop_footer
      %s20 = sadd.s32 1, %s16
    $region7: #{tpu_custom_call.1} parent=1 // loop_footer_branch
      %15 = sbr.rel target = $region3
    $region8: #{tpu_custom_call.1} parent=1 // loop_exit
      _
    %948 = vsyncpa [#allocation3], 1
    %s949 = scalar_lea.sflag [#allocation3], 1
    %950 = vsyncpa %s949, 1
    %951 = vsyncpa [#allocation6], 1
    %952 = vsyncpa [#allocation4], 1
    %s953 = scalar_lea.sflag [#allocation4], 1
    %954 = vsyncpa %s953, 1

</llo_original>
